<compile_context>
chip_gen: v7x
topology: tpu7x:2x2x1
jax: 0.10.0
libtpu: 0.0.40
codegen_flags: <defaults>
</compile_context>

<pallas_src>
import functools

import jax
import jax.numpy as jnp
from jax.experimental import pallas as pl
from jax.experimental.pallas import tpu as pltpu

SLIDE_WINSIZE = 9.0  # 3*3 kernel, single-channel mask (PartialConv multi_channel=False)


def _round_up(v, m):
    return ((v + m - 1) // m) * m


def pcatt_kernel(x_ref, m_ref, ctx_ref, w_ref, bc_ref, ba_ref,
                 out_ref, mout_ref, *, H, W):
    # x_ref   : (1, Cin,  H*W)  lane-dense NCHW activation
    # m_ref   : (1, 1,    H*W)  mask
    # ctx_ref : (1, Cctx, H*W)  context encoding
    # w_ref   : (2*Cout_p+8, 9*Cp+Cctx_p)  fused conv taps + mask box-sum + attention
    # bc_ref  : (Cout, 1)       conv bias (f32)
    # ba_ref  : (Cout, 1)       attention bias (f32)
    # out_ref : (1, Cout, H*W)  lane-dense output
    # mout_ref: (1, 1,    H*W)  updated mask
    Cin = x_ref.shape[1]
    Cctx = ctx_ref.shape[1]
    Cout = out_ref.shape[1]
    HW = H * W
    Cp = _round_up(Cin + 1, 8)
    Cout_p = _round_up(Cout, 8)
    Cctx_p = _round_up(Cctx, 8)

    x = x_ref[0].astype(jnp.float32)      # (Cin, HW)
    m = m_ref[0].astype(jnp.float32)      # (1,   HW)
    ctx = ctx_ref[0].astype(jnp.float32)  # (Cctx, HW)

    # Hoisted mask multiply; mask appended as an extra channel so the 3x3 mask
    # box-sum falls out of the same fused matmul; zero-pad channels so every
    # tap block is a sublane multiple (no repack in the concat below).
    blocks = [x * m, m]
    if Cp > Cin + 1:
        blocks.append(jnp.zeros((Cp - Cin - 1, HW), jnp.float32))
    combined = jnp.concatenate(blocks, axis=0)          # (Cp, HW)

    # Boundary masks for the implicit zero padding (computed once, reused per tap).
    lane = jax.lax.broadcasted_iota(jnp.int32, (1, HW), 1)
    col = lane % W
    col_valid = {-1: col != 0, 0: None, 1: col != (W - 1)}
    row_valid = {-1: lane >= W, 0: None, 1: lane < (H - 1) * W}

    # Roll-based im2col: shifted[p] = combined[(p + off) mod HW]; pltpu.roll
    # follows jnp.roll semantics (out[i] = in[(i - shift) mod n]) so shift = -off.
    taps = []
    for dy in (-1, 0, 1):
        for dx in (-1, 0, 1):
            off = dy * W + dx
            v = combined if off == 0 else pltpu.roll(combined, (-off) % HW, axis=1)
            rm, cm = row_valid[dy], col_valid[dx]
            if rm is None:
                tap_mask = cm
            elif cm is None:
                tap_mask = rm
            else:
                tap_mask = jnp.logical_and(rm, cm)
            if tap_mask is not None:
                v = jnp.where(tap_mask, v, 0.0)
            taps.append(v)

    if Cctx_p > Cctx:
        ctx = jnp.concatenate(
            [ctx, jnp.zeros((Cctx_p - Cctx, HW), jnp.float32)], axis=0)

    patches = jnp.concatenate(taps + [ctx], axis=0)     # (9*Cp + Cctx_p, HW), f32
    patches = patches.astype(w_ref.dtype)               # single cast -> bf16 MXU feed

    # One fused MXU matmul: rows [0:Cout] raw partial-conv numerator,
    # row Cout_p = 3x3 mask coverage, rows [Cout_p+8 : Cout_p+8+Cout] = pre-sigmoid
    # attention (1x1 conv of context).  All slice starts are sublane-aligned.
    acc = jnp.dot(w_ref[...], patches,
                  preferred_element_type=jnp.float32)   # (2*Cout_p+8, HW) f32

    conv_raw = acc[:Cout, :]                            # (Cout, HW)
    msum = acc[Cout_p:Cout_p + 1, :]                    # (1, HW)
    att_pre = acc[Cout_p + 8:Cout_p + 8 + Cout, :]      # (Cout, HW)

    valid = msum > 0.0
    # Exact divide (not approx reciprocal) to match torch's renormalization.
    ratio = jnp.where(valid, SLIDE_WINSIZE / jnp.where(valid, msum, 1.0), 0.0)
    out = jnp.where(valid, conv_raw * ratio + bc_ref[...], 0.0)

    att = jax.nn.sigmoid(att_pre + ba_ref[...])
    out = jnp.maximum(out * att, 0.0)

    out_ref[0] = out.astype(out_ref.dtype)
    mout_ref[0] = valid.astype(mout_ref.dtype)


def structure_encoder_forward(x_nchw, mask_nchw, context_nchw, params):
    """x: (N,Cin,H,W), mask: (N,1,H,W), context: (N,Cctx,H,W) -> (out, new_mask) NCHW."""
    N, Cin, H, W = x_nchw.shape
    Cctx = context_nchw.shape[1]
    Cout = params["b_conv"].shape[0]
    HW = H * W

    # Contiguous reshapes only (free metadata ops); no transpose, no pad in HBM.
    x = x_nchw.reshape(N, Cin, HW)
    m = mask_nchw.reshape(N, 1, HW)
    ctx = context_nchw.reshape(N, Cctx, HW)

    kernel = functools.partial(pcatt_kernel, H=H, W=W)

    out, new_mask = pl.pallas_call(
        kernel,
        out_shape=(jax.ShapeDtypeStruct((N, Cout, HW), x_nchw.dtype),
                   jax.ShapeDtypeStruct((N, 1, HW), mask_nchw.dtype)),
        grid_spec=pltpu.PrefetchScalarGridSpec(
            num_scalar_prefetch=0,
            grid=(N,),
            in_specs=[
                pl.BlockSpec((1, Cin, HW), lambda b: (b, 0, 0)),
                pl.BlockSpec((1, 1, HW), lambda b: (b, 0, 0)),
                pl.BlockSpec((1, Cctx, HW), lambda b: (b, 0, 0)),
                pl.BlockSpec(params["w_fused"].shape, lambda b: (0, 0)),
                pl.BlockSpec(params["b_conv"].shape, lambda b: (0, 0)),
                pl.BlockSpec(params["b_att"].shape, lambda b: (0, 0)),
            ],
            out_specs=[
                pl.BlockSpec((1, Cout, HW), lambda b: (b, 0, 0)),
                pl.BlockSpec((1, 1, HW), lambda b: (b, 0, 0)),
            ],
        ),
        compiler_params=pltpu.CompilerParams(
            dimension_semantics=("parallel",)),
    )(x, m, ctx, params["w_fused"], params["b_conv"], params["b_att"])

    return out.reshape(N, Cout, H, W), new_mask.reshape(N, 1, H, W)


def build_fused_weight(w_conv, w_att, dtype=jnp.bfloat16):
    """w_conv: (Cout, Cin, 3, 3) torch Conv2d layout; w_att: (Cout, Cctx).

    Returns (2*Cout_p+8, 9*Cp+Cctx_p):
      rows [0:Cout]                    raw partial-conv numerator over (x*mask),
      row  Cout_p                      3x3 mask box-sum (ones on the mask channel),
      rows [Cout_p+8 : Cout_p+8+Cout]  1x1 attention conv over the context columns.
    Column order matches the kernel: tap-major ((dy,dx) row-major), channel-minor
    with the mask as channel Cin of each Cp-wide tap block; context columns last.
    """
    Cout, Cin, KH, KW = w_conv.shape
    assert KH == 3 and KW == 3
    Cctx = w_att.shape[1]
    Cp = _round_up(Cin + 1, 8)
    Cout_p = _round_up(Cout, 8)
    Cctx_p = _round_up(Cctx, 8)
    K = 9 * Cp + Cctx_p
    M = 2 * Cout_p + 8

    w = jnp.zeros((M, K), jnp.float32)
    w_taps = jnp.transpose(w_conv, (2, 3, 0, 1)).reshape(9, Cout, Cin)  # (tap, Cout, Cin)
    for t in range(9):
        w = w.at[0:Cout, t * Cp:t * Cp + Cin].set(w_taps[t])
        w = w.at[Cout_p, t * Cp + Cin].set(1.0)
    w = w.at[Cout_p + 8:Cout_p + 8 + Cout, 9 * Cp:9 * Cp + Cctx].set(w_att)
    return w.astype(dtype)


def init_params(key, in_channels, out_channels, context_channels,
                matmul_dtype=jnp.bfloat16):
    k1, k2 = jax.random.split(key)
    w_conv = (jax.random.normal(
        k1, (out_channels, in_channels, 3, 3), jnp.float32)
        * (1.0 / (3.0 * jnp.sqrt(float(in_channels)))))
    b_conv = jnp.zeros((out_channels, 1), jnp.float32)
    w_att = (jax.random.normal(
        k2, (out_channels, context_channels), jnp.float32)
        * (1.0 / jnp.sqrt(float(context_channels))))
    b_att = jnp.zeros((out_channels, 1), jnp.float32)
    return {"w_fused": build_fused_weight(w_conv, w_att, matmul_dtype),
            "b_conv": b_conv, "b_att": b_att}


if __name__ == "__main__":
    key = jax.random.PRNGKey(0)
    kx, km, kc, kp = jax.random.split(key, 4)

    N, Cin, Cout, Cctx, H, W = 2, 4, 8, 3, 16, 16
    x = jax.random.normal(kx, (N, Cin, H, W), jnp.float32)
    mask = (jax.random.uniform(km, (N, 1, H, W)) > 0.3).astype(jnp.float32)
    context = jax.random.normal(kc, (N, Cctx, H, W), jnp.float32)

    params = init_params(kp, Cin, Cout, Cctx)

    out, new_mask = structure_encoder_forward(x, mask, context, params)
    jax.block_until_ready((out, new_mask))
    assert out.shape == (N, Cout, H, W)
    assert new_mask.shape == (N, 1, H, W)
    print("KERNEL_OK")
</pallas_src>

<mosaic_0001>
module attributes {stable_mosaic.version = 11 : i64} {
  func.func @pcatt_kernel(%arg0: i32, %arg1: memref<1x4x256xf32, #tpu.memory_space<vmem>>, %arg2: memref<1x1x256xf32, #tpu.memory_space<vmem>>, %arg3: memref<1x3x256xf32, #tpu.memory_space<vmem>>, %arg4: memref<24x80xbf16, #tpu.memory_space<vmem>>, %arg5: memref<8x1xf32, #tpu.memory_space<vmem>>, %arg6: memref<8x1xf32, #tpu.memory_space<vmem>>, %arg7: memref<1x8x256xf32, #tpu.memory_space<vmem>>, %arg8: memref<1x1x256xf32, #tpu.memory_space<vmem>>) attributes {dimension_semantics = [#tpu.dimension_semantics<parallel>], iteration_bounds = array<i64: 2>, scalar_prefetch = 0 : i64, scratch_operands = 0 : i64, tpu.core_type = #tpu.core_type<tc>, window_params = [{transform_indices = @transform_0, window_bounds = array<i64: 1, 4, 256>}, {transform_indices = @transform_1, window_bounds = array<i64: 1, 1, 256>}, {transform_indices = @transform_2, window_bounds = array<i64: 1, 3, 256>}, {pipeline_mode = #tpu.pipeline_mode<synchronous>, transform_indices = @transform_3, window_bounds = array<i64: 24, 80>}, {pipeline_mode = #tpu.pipeline_mode<synchronous>, transform_indices = @transform_4, window_bounds = array<i64: 8, 1>}, {pipeline_mode = #tpu.pipeline_mode<synchronous>, transform_indices = @transform_5, window_bounds = array<i64: 8, 1>}, {transform_indices = @transform_6, window_bounds = array<i64: 1, 8, 256>}, {transform_indices = @transform_7, window_bounds = array<i64: 1, 1, 256>}]} {
    %c0 = arith.constant 0 : index
    %c0_0 = arith.constant 0 : index
    %c0_1 = arith.constant 0 : index
    %0 = vector.load %arg1[%c0, %c0_0, %c0_1] : memref<1x4x256xf32, #tpu.memory_space<vmem>>, vector<1x4x256xf32>
    %1 = vector.shape_cast %0 : vector<1x4x256xf32> to vector<4x256xf32>
    %c0_2 = arith.constant 0 : index
    %c0_3 = arith.constant 0 : index
    %c0_4 = arith.constant 0 : index
    %2 = vector.load %arg2[%c0_2, %c0_3, %c0_4] : memref<1x1x256xf32, #tpu.memory_space<vmem>>, vector<1x1x256xf32>
    %3 = vector.shape_cast %2 : vector<1x1x256xf32> to vector<1x256xf32>
    %c0_5 = arith.constant 0 : index
    %c0_6 = arith.constant 0 : index
    %c0_7 = arith.constant 0 : index
    %4 = vector.load %arg3[%c0_5, %c0_6, %c0_7] : memref<1x3x256xf32, #tpu.memory_space<vmem>>, vector<1x3x256xf32>
    %5 = vector.shape_cast %4 : vector<1x3x256xf32> to vector<3x256xf32>
    %6 = vector.broadcast %3 : vector<1x256xf32> to vector<4x256xf32>
    %7 = arith.mulf %1, %6 : vector<4x256xf32>
    %cst = arith.constant 0.000000e+00 : f32
    %8 = vector.broadcast %cst : f32 to vector<3x256xf32>
    %9 = tpu.concatenate %7, %3, %8 in 0 : vector<4x256xf32>, vector<1x256xf32>, vector<3x256xf32> -> vector<8x256xf32>
    %10 = tpu.iota {dimensions = array<i32: 1>} : vector<1x256xi32>
    %c16_i32 = arith.constant 16 : i32
    %c0_i32 = arith.constant 0 : i32
    %11 = arith.cmpi eq, %c16_i32, %c0_i32 : i32
    %c1_i32 = arith.constant 1 : i32
    %12 = arith.select %11, %c1_i32, %c16_i32 : i32
    %13 = vector.broadcast %12 : i32 to vector<1x256xi32>
    %14 = arith.remsi %10, %13 : vector<1x256xi32>
    %c0_i32_8 = arith.constant 0 : i32
    %15 = vector.broadcast %c0_i32_8 : i32 to vector<1x256xi32>
    %16 = arith.cmpi ne, %14, %15 : vector<1x256xi32>
    %c0_i32_9 = arith.constant 0 : i32
    %17 = vector.broadcast %c0_i32_9 : i32 to vector<1x256xi32>
    %18 = arith.cmpi slt, %14, %17 : vector<1x256xi32>
    %c0_i32_10 = arith.constant 0 : i32
    %19 = arith.cmpi slt, %12, %c0_i32_10 : i32
    %20 = vector.broadcast %19 : i1 to vector<1x256xi1>
    %21 = vector.broadcast %20 : vector<1x256xi1> to vector<1x256xi1>
    %22 = arith.xori %18, %21 : vector<1x256xi1>
    %23 = arith.andi %22, %16 : vector<1x256xi1>
    %24 = vector.broadcast %12 : i32 to vector<1x256xi32>
    %25 = arith.addi %14, %24 : vector<1x256xi32>
    %26 = arith.select %23, %25, %14 : vector<1x256xi1>, vector<1x256xi32>
    %c0_i32_11 = arith.constant 0 : i32
    %27 = vector.broadcast %c0_i32_11 : i32 to vector<1x256xi32>
    %28 = arith.cmpi ne, %26, %27 : vector<1x256xi32>
    %c15_i32 = arith.constant 15 : i32
    %29 = vector.broadcast %c15_i32 : i32 to vector<1x256xi32>
    %30 = arith.cmpi ne, %26, %29 : vector<1x256xi32>
    %c16_i32_12 = arith.constant 16 : i32
    %31 = vector.broadcast %c16_i32_12 : i32 to vector<1x256xi32>
    %32 = arith.cmpi sge, %10, %31 : vector<1x256xi32>
    %c240_i32 = arith.constant 240 : i32
    %33 = vector.broadcast %c240_i32 : i32 to vector<1x256xi32>
    %34 = arith.cmpi slt, %10, %33 : vector<1x256xi32>
    %c17_i32 = arith.constant 17 : i32
    %35 = tpu.dynamic_rotate %9 by %c17_i32 dim 1 : vector<8x256xf32>, i32 -> vector<8x256xf32>
    %36 = arith.andi %32, %28 : vector<1x256xi1>
    %cst_13 = arith.constant 0.000000e+00 : f32
    %37 = vector.shape_cast %36 : vector<1x256xi1> to vector<1x256xi1>
    %38 = vector.broadcast %37 : vector<1x256xi1> to vector<8x256xi1>
    %39 = vector.broadcast %cst_13 : f32 to vector<8x256xf32>
    %40 = arith.select %38, %35, %39 : vector<8x256xi1>, vector<8x256xf32>
    %c16_i32_14 = arith.constant 16 : i32
    %41 = tpu.dynamic_rotate %9 by %c16_i32_14 dim 1 : vector<8x256xf32>, i32 -> vector<8x256xf32>
    %cst_15 = arith.constant 0.000000e+00 : f32
    %42 = vector.shape_cast %32 : vector<1x256xi1> to vector<1x256xi1>
    %43 = vector.broadcast %42 : vector<1x256xi1> to vector<8x256xi1>
    %44 = vector.broadcast %cst_15 : f32 to vector<8x256xf32>
    %45 = arith.select %43, %41, %44 : vector<8x256xi1>, vector<8x256xf32>
    %c15_i32_16 = arith.constant 15 : i32
    %46 = tpu.dynamic_rotate %9 by %c15_i32_16 dim 1 : vector<8x256xf32>, i32 -> vector<8x256xf32>
    %47 = arith.andi %32, %30 : vector<1x256xi1>
    %cst_17 = arith.constant 0.000000e+00 : f32
    %48 = vector.shape_cast %47 : vector<1x256xi1> to vector<1x256xi1>
    %49 = vector.broadcast %48 : vector<1x256xi1> to vector<8x256xi1>
    %50 = vector.broadcast %cst_17 : f32 to vector<8x256xf32>
    %51 = arith.select %49, %46, %50 : vector<8x256xi1>, vector<8x256xf32>
    %c1_i32_18 = arith.constant 1 : i32
    %52 = tpu.dynamic_rotate %9 by %c1_i32_18 dim 1 : vector<8x256xf32>, i32 -> vector<8x256xf32>
    %cst_19 = arith.constant 0.000000e+00 : f32
    %53 = vector.shape_cast %28 : vector<1x256xi1> to vector<1x256xi1>
    %54 = vector.broadcast %53 : vector<1x256xi1> to vector<8x256xi1>
    %55 = vector.broadcast %cst_19 : f32 to vector<8x256xf32>
    %56 = arith.select %54, %52, %55 : vector<8x256xi1>, vector<8x256xf32>
    %c255_i32 = arith.constant 255 : i32
    %57 = tpu.dynamic_rotate %9 by %c255_i32 dim 1 : vector<8x256xf32>, i32 -> vector<8x256xf32>
    %cst_20 = arith.constant 0.000000e+00 : f32
    %58 = vector.shape_cast %30 : vector<1x256xi1> to vector<1x256xi1>
    %59 = vector.broadcast %58 : vector<1x256xi1> to vector<8x256xi1>
    %60 = vector.broadcast %cst_20 : f32 to vector<8x256xf32>
    %61 = arith.select %59, %57, %60 : vector<8x256xi1>, vector<8x256xf32>
    %c241_i32 = arith.constant 241 : i32
    %62 = tpu.dynamic_rotate %9 by %c241_i32 dim 1 : vector<8x256xf32>, i32 -> vector<8x256xf32>
    %63 = arith.andi %34, %28 : vector<1x256xi1>
    %cst_21 = arith.constant 0.000000e+00 : f32
    %64 = vector.shape_cast %63 : vector<1x256xi1> to vector<1x256xi1>
    %65 = vector.broadcast %64 : vector<1x256xi1> to vector<8x256xi1>
    %66 = vector.broadcast %cst_21 : f32 to vector<8x256xf32>
    %67 = arith.select %65, %62, %66 : vector<8x256xi1>, vector<8x256xf32>
    %c240_i32_22 = arith.constant 240 : i32
    %68 = tpu.dynamic_rotate %9 by %c240_i32_22 dim 1 : vector<8x256xf32>, i32 -> vector<8x256xf32>
    %cst_23 = arith.constant 0.000000e+00 : f32
    %69 = vector.shape_cast %34 : vector<1x256xi1> to vector<1x256xi1>
    %70 = vector.broadcast %69 : vector<1x256xi1> to vector<8x256xi1>
    %71 = vector.broadcast %cst_23 : f32 to vector<8x256xf32>
    %72 = arith.select %70, %68, %71 : vector<8x256xi1>, vector<8x256xf32>
    %c239_i32 = arith.constant 239 : i32
    %73 = tpu.dynamic_rotate %9 by %c239_i32 dim 1 : vector<8x256xf32>, i32 -> vector<8x256xf32>
    %74 = arith.andi %34, %30 : vector<1x256xi1>
    %cst_24 = arith.constant 0.000000e+00 : f32
    %75 = vector.shape_cast %74 : vector<1x256xi1> to vector<1x256xi1>
    %76 = vector.broadcast %75 : vector<1x256xi1> to vector<8x256xi1>
    %77 = vector.broadcast %cst_24 : f32 to vector<8x256xf32>
    %78 = arith.select %76, %73, %77 : vector<8x256xi1>, vector<8x256xf32>
    %cst_25 = arith.constant 0.000000e+00 : f32
    %79 = vector.broadcast %cst_25 : f32 to vector<5x256xf32>
    %80 = tpu.concatenate %5, %79 in 0 : vector<3x256xf32>, vector<5x256xf32> -> vector<8x256xf32>
    %81 = tpu.concatenate %40, %45, %51, %56, %9, %61, %67, %72, %78, %80 in 0 : vector<8x256xf32>, vector<8x256xf32>, vector<8x256xf32>, vector<8x256xf32>, vector<8x256xf32>, vector<8x256xf32>, vector<8x256xf32>, vector<8x256xf32>, vector<8x256xf32>, vector<8x256xf32> -> vector<80x256xf32>
    %82 = arith.truncf %81 : vector<80x256xf32> to vector<80x256xbf16>
    %c0_26 = arith.constant 0 : index
    %c0_27 = arith.constant 0 : index
    %83 = vector.load %arg4[%c0_26, %c0_27] : memref<24x80xbf16, #tpu.memory_space<vmem>>, vector<24x80xbf16>
    %cst_28 = arith.constant dense<0.000000e+00> : vector<24x256xf32>
    %84 = tpu.matmul %83, %82, %cst_28 {dimension_numbers = #tpu.dot_dimension_numbers<[1], [0], [0], [1], [0, 0, 1, 1], [], []>} : vector<24x80xbf16>, vector<80x256xbf16>, vector<24x256xf32> -> vector<24x256xf32>
    %85 = vector.extract_strided_slice %84 {offsets = [0, 0], sizes = [8, 256], strides = [1, 1]} : vector<24x256xf32> to vector<8x256xf32>
    %86 = vector.extract_strided_slice %84 {offsets = [8, 0], sizes = [1, 256], strides = [1, 1]} : vector<24x256xf32> to vector<1x256xf32>
    %87 = vector.extract_strided_slice %84 {offsets = [16, 0], sizes = [8, 256], strides = [1, 1]} : vector<24x256xf32> to vector<8x256xf32>
    %cst_29 = arith.constant 0.000000e+00 : f32
    %88 = vector.broadcast %cst_29 : f32 to vector<1x256xf32>
    %89 = arith.cmpf ogt, %86, %88 : vector<1x256xf32>
    %cst_30 = arith.constant 1.000000e+00 : f32
    %90 = vector.broadcast %cst_30 : f32 to vector<1x256xf32>
    %91 = arith.select %89, %86, %90 : vector<1x256xi1>, vector<1x256xf32>
    %cst_31 = arith.constant 9.000000e+00 : f32
    %92 = vector.broadcast %cst_31 : f32 to vector<1x256xf32>
    %93 = arith.divf %92, %91 : vector<1x256xf32>
    %cst_32 = arith.constant 0.000000e+00 : f32
    %94 = vector.broadcast %cst_32 : f32 to vector<1x256xf32>
    %95 = arith.select %89, %93, %94 : vector<1x256xi1>, vector<1x256xf32>
    %96 = vector.broadcast %95 : vector<1x256xf32> to vector<8x256xf32>
    %97 = arith.mulf %85, %96 : vector<8x256xf32>
    %c0_33 = arith.constant 0 : index
    %c0_34 = arith.constant 0 : index
    %98 = vector.load %arg5[%c0_33, %c0_34] : memref<8x1xf32, #tpu.memory_space<vmem>>, vector<8x1xf32>
    %99 = vector.broadcast %98 : vector<8x1xf32> to vector<8x256xf32>
    %100 = arith.addf %97, %99 : vector<8x256xf32>
    %cst_35 = arith.constant 0.000000e+00 : f32
    %101 = vector.shape_cast %89 : vector<1x256xi1> to vector<1x256xi1>
    %102 = vector.broadcast %101 : vector<1x256xi1> to vector<8x256xi1>
    %103 = vector.broadcast %cst_35 : f32 to vector<8x256xf32>
    %104 = arith.select %102, %100, %103 : vector<8x256xi1>, vector<8x256xf32>
    %c0_36 = arith.constant 0 : index
    %c0_37 = arith.constant 0 : index
    %105 = vector.load %arg6[%c0_36, %c0_37] : memref<8x1xf32, #tpu.memory_space<vmem>>, vector<8x1xf32>
    %106 = vector.broadcast %105 : vector<8x1xf32> to vector<8x256xf32>
    %107 = arith.addf %87, %106 : vector<8x256xf32>
    %108 = arith.negf %107 : vector<8x256xf32>
    %109 = math.exp %108 : vector<8x256xf32>
    %cst_38 = arith.constant 1.000000e+00 : f32
    %110 = vector.broadcast %cst_38 : f32 to vector<8x256xf32>
    %111 = arith.addf %110, %109 : vector<8x256xf32>
    %112 = arith.divf %110, %111 : vector<8x256xf32>
    %113 = arith.mulf %104, %112 : vector<8x256xf32>
    %cst_39 = arith.constant 0.000000e+00 : f32
    %114 = vector.broadcast %cst_39 : f32 to vector<8x256xf32>
    %115 = arith.maximumf %113, %114 : vector<8x256xf32>
    %c0_40 = arith.constant 0 : index
    %c0_41 = arith.constant 0 : index
    %c0_42 = arith.constant 0 : index
    %116 = vector.load %arg7[%c0_40, %c0_41, %c0_42] : memref<1x8x256xf32, #tpu.memory_space<vmem>>, vector<1x8x256xf32>
    %117 = vector.shape_cast %116 : vector<1x8x256xf32> to vector<8x256xf32>
    %118 = vector.shape_cast %115 : vector<8x256xf32> to vector<1x8x256xf32>
    tpu.vector_store %arg7[%c0_40, %c0_41, %c0_42], %118 {strides = array<i32>} : memref<1x8x256xf32, #tpu.memory_space<vmem>>, vector<1x8x256xf32>,
    %119 = arith.extui %89 : vector<1x256xi1> to vector<1x256xi32>
    %120 = arith.sitofp %119 : vector<1x256xi32> to vector<1x256xf32>
    %c0_43 = arith.constant 0 : index
    %c0_44 = arith.constant 0 : index
    %c0_45 = arith.constant 0 : index
    %121 = vector.load %arg8[%c0_43, %c0_44, %c0_45] : memref<1x1x256xf32, #tpu.memory_space<vmem>>, vector<1x1x256xf32>
    %122 = vector.shape_cast %121 : vector<1x1x256xf32> to vector<1x256xf32>
    %123 = vector.shape_cast %120 : vector<1x256xf32> to vector<1x1x256xf32>
    tpu.vector_store %arg8[%c0_43, %c0_44, %c0_45], %123 {strides = array<i32>} : memref<1x1x256xf32, #tpu.memory_space<vmem>>, vector<1x1x256xf32>,
    return
  }
  func.func @transform_0(%arg0: i32) -> (i32, i32, i32) {
    %c0_i32 = arith.constant 0 : i32
    %c0_i32_0 = arith.constant 0 : i32
    %c0_i32_1 = arith.constant 0 : i32
    return %arg0, %c0_i32, %c0_i32_0 : i32, i32, i32
  }
  func.func @transform_1(%arg0: i32) -> (i32, i32, i32) {
    %c0_i32 = arith.constant 0 : i32
    %c0_i32_0 = arith.constant 0 : i32
    %c0_i32_1 = arith.constant 0 : i32
    return %arg0, %c0_i32, %c0_i32_0 : i32, i32, i32
  }
  func.func @transform_2(%arg0: i32) -> (i32, i32, i32) {
    %c0_i32 = arith.constant 0 : i32
    %c0_i32_0 = arith.constant 0 : i32
    %c0_i32_1 = arith.constant 0 : i32
    return %arg0, %c0_i32, %c0_i32_0 : i32, i32, i32
  }
  func.func @transform_3(%arg0: i32) -> (i32, i32) {
    %c0_i32 = arith.constant 0 : i32
    %c0_i32_0 = arith.constant 0 : i32
    %c0_i32_1 = arith.constant 0 : i32
    return %c0_i32, %c0_i32_0 : i32, i32
  }
  func.func @transform_4(%arg0: i32) -> (i32, i32) {
    %c0_i32 = arith.constant 0 : i32
    %c0_i32_0 = arith.constant 0 : i32
    %c0_i32_1 = arith.constant 0 : i32
    return %c0_i32, %c0_i32_0 : i32, i32
  }
  func.func @transform_5(%arg0: i32) -> (i32, i32) {
    %c0_i32 = arith.constant 0 : i32
    %c0_i32_0 = arith.constant 0 : i32
    %c0_i32_1 = arith.constant 0 : i32
    return %c0_i32, %c0_i32_0 : i32, i32
  }
  func.func @transform_6(%arg0: i32) -> (i32, i32, i32) {
    %c0_i32 = arith.constant 0 : i32
    %c0_i32_0 = arith.constant 0 : i32
    %c0_i32_1 = arith.constant 0 : i32
    return %arg0, %c0_i32, %c0_i32_0 : i32, i32, i32
  }
  func.func @transform_7(%arg0: i32) -> (i32, i32, i32) {
    %c0_i32 = arith.constant 0 : i32
    %c0_i32_0 = arith.constant 0 : i32
    %c0_i32_1 = arith.constant 0 : i32
    return %arg0, %c0_i32, %c0_i32_0 : i32, i32, i32
  }
}

</mosaic_0001>

<llo_original>
// kernel: tpu_custom_call.1
$region0: #{tpu_custom_call.1}
  #allocation0 [shape = 'u32[]', space=smem, size = 0x4, offset = 0x4, fixed_abs, tag = 'smem constant byte address 0x4 - core index']
  #allocation1 [shape = 'u32[144,128]{1,0:T(1,128)}', space=vmem, size = 0x12000, scoped, tag = 'internal scratch']
  %s0 = inlined_call_operand.vmem [shape: f32[2,4,256], index: 0, kind: input, shape index: {}]
  %s1 = inlined_call_operand.vmem [shape: f32[2,1,256], index: 1, kind: input, shape index: {}]
  %s2 = inlined_call_operand.vmem [shape: f32[2,3,256], index: 2, kind: input, shape index: {}]
  %s3 = inlined_call_operand.vmem [shape: bf16[24,80], index: 3, kind: input, shape index: {}]
  %s4 = inlined_call_operand.vmem [shape: f32[8,1], index: 4, kind: input, shape index: {}]
  %s5 = inlined_call_operand.vmem [shape: f32[8,1], index: 5, kind: input, shape index: {}]
  %s6 = inlined_call_operand.hbm [shape: f32[2,8,256], index: 6, kind: output, shape index: {0}]
  %s7 = inlined_call_operand.hbm [shape: f32[2,1,256], index: 7, kind: output, shape index: {1}]
  %8 = xla_tuple %s6, %s7
  %s9 = sld [smem:[#allocation0]]
  $region65: #{tpu_custom_call.1} parent=0
    _
  %s11 = ssub.s32 1, %s9
  %s12 = scalar_select 0, %s11, %s9
  $region1: #{tpu_custom_call.1} parent=0
    #allocation2 [shape = 'u8[16384]{0}', space=vmem, size = 0x4000, scoped, tag = 'output window, operand 0']
    #allocation3 [shape = 's32[2]{0}', space=sflag, size = 0x8, scoped, tag = 'scoped memory for tpu_custom_call.1']
    #allocation4 [shape = 'u8[2048]{0}', space=vmem, size = 0x800, scoped, tag = 'output window, operand 1']
    #allocation5 [shape = 's32[2]{0}', space=sflag, size = 0x8, scoped, tag = 'scoped memory for tpu_custom_call.1']
    %13 = vsyncpa [#allocation3], 0
    %s14 = scalar_lea.sflag [#allocation3], 1
    %15 = vsyncpa %s14, 0
    %16 = vsyncpa [#allocation5], 0
    %s17 = scalar_lea.sflag [#allocation5], 1
    %18 = vsyncpa %s17, 0
    loop: start=0, step=1, limit=4
    $region2: #{tpu_custom_call.1} parent=1 // loop_pre_header
      _
    $region3: #{tpu_custom_call.1} parent=1 // loop_header
      %s20 = sphi 0, %s24
      %p21 = scmp.ge.s32.totalorder %s20, 4
      %s30 = sphi 0, %s32
      %s33 = sphi 0, %s30
      %s34 = sphi 0, %s33
      %s50 = sphi 0, %s34
      %s56 = sphi 0, %s58
      %s59 = sphi 0, %s56
      %s60 = sphi 0, %s59
      %s76 = sphi 0, %s60
      %s82 = sphi 0, %s84
      %s85 = sphi 0, %s82
      %s86 = sphi 0, %s85
      %s102 = sphi 0, %s86
      %s106 = sphi 0, %s106
      %s108 = sphi 0, %s106
      %s109 = sphi 0, %s108
      %s123 = sphi 0, %s109
      %s127 = sphi 0, %s127
      %s129 = sphi 0, %s127
      %s130 = sphi 0, %s129
      %s144 = sphi 0, %s130
      %s148 = sphi 0, %s148
      %s150 = sphi 0, %s148
      %s151 = sphi 0, %s150
      %s165 = sphi 0, %s151
      %s171 = sphi 0, %s173
      %s174 = sphi 0, %s171
      %s175 = sphi 0, %s174
      %s191 = sphi 0, %s175
      %s197 = sphi 0, %s199
      %s200 = sphi 0, %s197
      %s201 = sphi 0, %s200
      %s217 = sphi 0, %s201
    $region4: #{tpu_custom_call.1} parent=1 // loop_header_branch
      %23 = sbr.rel (%p21) target = $region8
    $region5: #{tpu_custom_call.1} parent=1 // loop_body
      %s25 = ssub.s32 %s20, 1
      %s26 = ssub.s32 %s20, 2
      %s27 = sadd.s32 %s20, 1
      %s28 = ssub.s32 %s20, %s27
      %p29 = scmp.eq.s32.totalorder %s28, 0
      %s31 = sadd.s32 %s30, 1
      %s32 = scalar_select %p29, %s30, %s31
      %p35 = pneg %p29
      %p36 = scmp.eq.s32.totalorder %s20, 1
      %p37 = por %p35, %p36
      %p38 = scmp.ne.s32.totalorder %s30, %s33
      %p39 = scmp.eq.s32.totalorder %s20, 0
      %p40 = por %p38, %p39
      %p41 = scmp.ne.s32.totalorder %s30, %s33
      %p42 = scmp.eq.s32.totalorder %s25, 1
      %p43 = por %p41, %p42
      %p44 = scmp.ne.s32.totalorder %s33, %s34
      %p45 = scmp.eq.s32.totalorder %s25, 0
      %p46 = por %p44, %p45
      %p47 = scmp.ne.s32.totalorder %s33, %s34
      %p48 = scmp.eq.s32.totalorder %s26, 1
      %p49 = por %p47, %p48
      %p51 = scmp.ne.s32.totalorder %s34, %s50
      %p52 = scmp.eq.s32.totalorder %s26, 0
      %p53 = por %p51, %p52
      %s54 = ssub.s32 %s20, %s27
      %p55 = scmp.eq.s32.totalorder %s54, 0
      %s57 = sadd.s32 %s56, 1
      %s58 = scalar_select %p55, %s56, %s57
      %p61 = pneg %p55
      %p62 = scmp.eq.s32.totalorder %s20, 1
      %p63 = por %p61, %p62
      %p64 = scmp.ne.s32.totalorder %s56, %s59
      %p65 = scmp.eq.s32.totalorder %s20, 0
      %p66 = por %p64, %p65
      %p67 = scmp.ne.s32.totalorder %s56, %s59
      %p68 = scmp.eq.s32.totalorder %s25, 1
      %p69 = por %p67, %p68
      %p70 = scmp.ne.s32.totalorder %s59, %s60
      %p71 = scmp.eq.s32.totalorder %s25, 0
      %p72 = por %p70, %p71
      %p73 = scmp.ne.s32.totalorder %s59, %s60
      %p74 = scmp.eq.s32.totalorder %s26, 1
      %p75 = por %p73, %p74
      %p77 = scmp.ne.s32.totalorder %s60, %s76
      %p78 = scmp.eq.s32.totalorder %s26, 0
      %p79 = por %p77, %p78
      %s80 = ssub.s32 %s20, %s27
      %p81 = scmp.eq.s32.totalorder %s80, 0
      %s83 = sadd.s32 %s82, 1
      %s84 = scalar_select %p81, %s82, %s83
      %p87 = pneg %p81
      %p88 = scmp.eq.s32.totalorder %s20, 1
      %p89 = por %p87, %p88
      %p90 = scmp.ne.s32.totalorder %s82, %s85
      %p91 = scmp.eq.s32.totalorder %s20, 0
      %p92 = por %p90, %p91
      %p93 = scmp.ne.s32.totalorder %s82, %s85
      %p94 = scmp.eq.s32.totalorder %s25, 1
      %p95 = por %p93, %p94
      %p96 = scmp.ne.s32.totalorder %s85, %s86
      %p97 = scmp.eq.s32.totalorder %s25, 0
      %p98 = por %p96, %p97
      %p99 = scmp.ne.s32.totalorder %s85, %s86
      %p100 = scmp.eq.s32.totalorder %s26, 1
      %p101 = por %p99, %p100
      %p103 = scmp.ne.s32.totalorder %s86, %s102
      %p104 = scmp.eq.s32.totalorder %s26, 0
      %p105 = por %p103, %p104
      %s107 = sadd.s32 %s106, 1
      %p110 = scmp.eq.s32.totalorder %s20, 1
      %p111 = scmp.ne.s32.totalorder %s106, %s108
      %p112 = scmp.eq.s32.totalorder %s20, 0
      %p113 = por %p111, %p112
      %p114 = scmp.ne.s32.totalorder %s106, %s108
      %p115 = scmp.eq.s32.totalorder %s25, 1
      %p116 = por %p114, %p115
      %p117 = scmp.ne.s32.totalorder %s108, %s109
      %p118 = scmp.eq.s32.totalorder %s25, 0
      %p119 = por %p117, %p118
      %p120 = scmp.ne.s32.totalorder %s108, %s109
      %p121 = scmp.eq.s32.totalorder %s26, 1
      %p122 = por %p120, %p121
      %p124 = scmp.ne.s32.totalorder %s109, %s123
      %p125 = scmp.eq.s32.totalorder %s26, 0
      %p126 = por %p124, %p125
      %s128 = sadd.s32 %s127, 1
      %p131 = scmp.eq.s32.totalorder %s20, 1
      %p132 = scmp.ne.s32.totalorder %s127, %s129
      %p133 = scmp.eq.s32.totalorder %s20, 0
      %p134 = por %p132, %p133
      %p135 = scmp.ne.s32.totalorder %s127, %s129
      %p136 = scmp.eq.s32.totalorder %s25, 1
      %p137 = por %p135, %p136
      %p138 = scmp.ne.s32.totalorder %s129, %s130
      %p139 = scmp.eq.s32.totalorder %s25, 0
      %p140 = por %p138, %p139
      %p141 = scmp.ne.s32.totalorder %s129, %s130
      %p142 = scmp.eq.s32.totalorder %s26, 1
      %p143 = por %p141, %p142
      %p145 = scmp.ne.s32.totalorder %s130, %s144
      %p146 = scmp.eq.s32.totalorder %s26, 0
      %p147 = por %p145, %p146
      %s149 = sadd.s32 %s148, 1
      %p152 = scmp.eq.s32.totalorder %s20, 1
      %p153 = scmp.ne.s32.totalorder %s148, %s150
      %p154 = scmp.eq.s32.totalorder %s20, 0
      %p155 = por %p153, %p154
      %p156 = scmp.ne.s32.totalorder %s148, %s150
      %p157 = scmp.eq.s32.totalorder %s25, 1
      %p158 = por %p156, %p157
      %p159 = scmp.ne.s32.totalorder %s150, %s151
      %p160 = scmp.eq.s32.totalorder %s25, 0
      %p161 = por %p159, %p160
      %p162 = scmp.ne.s32.totalorder %s150, %s151
      %p163 = scmp.eq.s32.totalorder %s26, 1
      %p164 = por %p162, %p163
      %p166 = scmp.ne.s32.totalorder %s151, %s165
      %p167 = scmp.eq.s32.totalorder %s26, 0
      %p168 = por %p166, %p167
      %s169 = ssub.s32 %s20, %s27
      %p170 = scmp.eq.s32.totalorder %s169, 0
      %s172 = sadd.s32 %s171, 1
      %s173 = scalar_select %p170, %s171, %s172
      %p176 = pneg %p170
      %p177 = scmp.eq.s32.totalorder %s20, 1
      %p178 = por %p176, %p177
      %p179 = scmp.ne.s32.totalorder %s171, %s174
      %p180 = scmp.eq.s32.totalorder %s20, 0
      %p181 = por %p179, %p180
      %p182 = scmp.ne.s32.totalorder %s171, %s174
      %p183 = scmp.eq.s32.totalorder %s25, 1
      %p184 = por %p182, %p183
      %p185 = scmp.ne.s32.totalorder %s174, %s175
      %p186 = scmp.eq.s32.totalorder %s25, 0
      %p187 = por %p185, %p186
      %p188 = scmp.ne.s32.totalorder %s174, %s175
      %p189 = scmp.eq.s32.totalorder %s26, 1
      %p190 = por %p188, %p189
      %p192 = scmp.ne.s32.totalorder %s175, %s191
      %p193 = scmp.eq.s32.totalorder %s26, 0
      %p194 = por %p192, %p193
      %s195 = ssub.s32 %s20, %s27
      %p196 = scmp.eq.s32.totalorder %s195, 0
      %s198 = sadd.s32 %s197, 1
      %s199 = scalar_select %p196, %s197, %s198
      %p202 = pneg %p196
      %p203 = scmp.eq.s32.totalorder %s20, 1
      %p204 = por %p202, %p203
      %p205 = scmp.ne.s32.totalorder %s197, %s200
      %p206 = scmp.eq.s32.totalorder %s20, 0
      %p207 = por %p205, %p206
      %p208 = scmp.ne.s32.totalorder %s197, %s200
      %p209 = scmp.eq.s32.totalorder %s25, 1
      %p210 = por %p208, %p209
      %p211 = scmp.ne.s32.totalorder %s200, %s201
      %p212 = scmp.eq.s32.totalorder %s25, 0
      %p213 = por %p211, %p212
      %p214 = scmp.ne.s32.totalorder %s200, %s201
      %p215 = scmp.eq.s32.totalorder %s26, 1
      %p216 = por %p214, %p215
      %p218 = scmp.ne.s32.totalorder %s201, %s217
      %p219 = scmp.eq.s32.totalorder %s26, 0
      %p220 = por %p218, %p219
      %p221 = scmp.le.s32.totalorder 1, %s20
      %p222 = scmp.lt.s32.totalorder %s20, 3
      %p223 = pnand %p221, %p222
      %p224 = pneg %p223
      // Predicated region
      $region9: #{tpu_custom_call.1} parent=5 // pred_check
        _
      $region10: #{tpu_custom_call.1} parent=5 // pred_check_branch
        %226 = sbr.rel (%p223) target = $region12
      $region11: #{tpu_custom_call.1} parent=5 // pred_region
        %s227 = ssub.s32 %s20, 1
        // Predicated region
        $region13: #{tpu_custom_call.1} parent=11 // pred_check
          %p228 = pneg %p119
        $region14: #{tpu_custom_call.1} parent=11 // pred_check_branch
          %230 = sbr.rel (%p228) target = $region16
        $region15: #{tpu_custom_call.1} parent=11 // pred_region
          _
        $region16: #{tpu_custom_call.1} parent=11 // pred_fallthru
          _
        // Predicated region
        $region17: #{tpu_custom_call.1} parent=11 // pred_check
          %p231 = pneg %p140
        $region18: #{tpu_custom_call.1} parent=11 // pred_check_branch
          %233 = sbr.rel (%p231) target = $region20
        $region19: #{tpu_custom_call.1} parent=11 // pred_region
          _
        $region20: #{tpu_custom_call.1} parent=11 // pred_fallthru
          _
        // Predicated region
        $region21: #{tpu_custom_call.1} parent=11 // pred_check
          %p234 = pneg %p161
        $region22: #{tpu_custom_call.1} parent=11 // pred_check_branch
          %236 = sbr.rel (%p234) target = $region24
        $region23: #{tpu_custom_call.1} parent=11 // pred_region
          _
        $region24: #{tpu_custom_call.1} parent=11 // pred_fallthru
          _
      $region12: #{tpu_custom_call.1} parent=5 // pred_fallthru
        _
      %p237 = scmp.lt.s32.totalorder %s20, 2
      // Predicated region
      $region25: #{tpu_custom_call.1} parent=5 // pred_check
        %p238 = pneg %p237
      $region26: #{tpu_custom_call.1} parent=5 // pred_check_branch
        %240 = sbr.rel (%p238) target = $region28
      $region27: #{tpu_custom_call.1} parent=5 // pred_region
        // Predicated region
        $region29: #{tpu_custom_call.1} parent=27 // pred_check
          %p241 = pneg %p40
        $region30: #{tpu_custom_call.1} parent=27 // pred_check_branch
          %243 = sbr.rel (%p241) target = $region32
        $region31: #{tpu_custom_call.1} parent=27 // pred_region
          %p244 = scmp.lt.s32.totalorder %s20, 1
          %s245 = scalar_select %p244, %s20, 1
          %s246 = smul.addr %s245, 2
          %s247 = smul.addr %s246, 4
          %s248 = scalar_lea.vmem %s0, %s247
        $region32: #{tpu_custom_call.1} parent=27 // pred_fallthru
          _
        // Predicated region
        $region33: #{tpu_custom_call.1} parent=27 // pred_check
          %p249 = pneg %p66
        $region34: #{tpu_custom_call.1} parent=27 // pred_check_branch
          %251 = sbr.rel (%p249) target = $region36
        $region35: #{tpu_custom_call.1} parent=27 // pred_region
          %p252 = scmp.lt.s32.totalorder %s20, 1
          %s253 = scalar_select %p252, %s20, 1
          %s254 = smul.addr %s253, 2
          %s255 = scalar_lea.vmem %s1, %s254
        $region36: #{tpu_custom_call.1} parent=27 // pred_fallthru
          _
        // Predicated region
        $region37: #{tpu_custom_call.1} parent=27 // pred_check
          %p256 = pneg %p92
        $region38: #{tpu_custom_call.1} parent=27 // pred_check_branch
          %258 = sbr.rel (%p256) target = $region40
        $region39: #{tpu_custom_call.1} parent=27 // pred_region
          %p259 = scmp.lt.s32.totalorder %s20, 1
          %s260 = scalar_select %p259, %s20, 1
          %s261 = smul.addr %s260, 2
          %s262 = smul.addr %s261, 4
          %s263 = scalar_lea.vmem %s2, %s262
        $region40: #{tpu_custom_call.1} parent=27 // pred_fallthru
          _
      $region28: #{tpu_custom_call.1} parent=5 // pred_fallthru
        _
      %p264 = scmp.le.s32.totalorder 1, %s20
      %p265 = scmp.lt.s32.totalorder %s20, 3
      %p266 = pnand %p264, %p265
      %p267 = pneg %p266
      // Predicated region
      $region41: #{tpu_custom_call.1} parent=5 // pred_check
        _
      $region42: #{tpu_custom_call.1} parent=5 // pred_check_branch
        %269 = sbr.rel (%p266) target = $region44
      $region43: #{tpu_custom_call.1} parent=5 // pred_region
        %s270 = ssub.s32 %s20, 1
        %p271 = scmp.lt.s32.totalorder %s25, 1
        %s272 = scalar_select %p271, %s25, 1
        %s273 = smul.addr %s272, 2
        %s274 = smul.addr %s273, 4
        %s275 = scalar_lea.vmem %s0, %s274
        %p276 = pneg %p46
        %p277 = pneg %p43
        %p278 = scmp.lt.s32.totalorder %s25, 1
        %s279 = scalar_select %p278, %s25, 1
        %s280 = smul.addr %s279, 2
        %s281 = scalar_lea.vmem %s1, %s280
        %p282 = pneg %p72
        %p283 = pneg %p69
        %p284 = scmp.lt.s32.totalorder %s25, 1
        %s285 = scalar_select %p284, %s25, 1
        %s286 = smul.addr %s285, 2
        %s287 = smul.addr %s286, 4
        %s288 = scalar_lea.vmem %s2, %s287
        %p289 = pneg %p98
        %p290 = pneg %p95
        %p291 = pneg %p119
        %p292 = pneg %p116
        %p293 = pneg %p140
        %p294 = pneg %p137
        %p295 = pneg %p161
        %p296 = pneg %p158
        %p297 = pneg %p187
        %p298 = pneg %p184
        %s299 = sand.u32 %s174, 1
        %s300 = scalar_lea.sflag [#allocation3], %s299
        %s301 = sand.u32 %s174, 1
        %s302 = smul.addr %s301, 16
        %s303 = scalar_lea.vmem [#allocation2], %s302
        %p304 = pneg %p213
        %p305 = pneg %p210
        %s306 = sand.u32 %s200, 1
        %s307 = scalar_lea.sflag [#allocation5], %s306
        %s308 = sand.u32 %s200, 1
        %s309 = smul.addr %s308, 2
        %s310 = scalar_lea.vmem [#allocation4], %s309
        %p311 = scmp.lt.s32.totalorder %s25, 1
        %s312 = scalar_select %p311, %s25, 1
        %s313 = smul.addr %s312, 2
        %s314 = smul.addr %s313, 4
        %s315 = scalar_lea.vmem %s0, %s314
        %p316 = scmp.lt.s32.totalorder %s25, 1
        %s317 = scalar_select %p316, %s25, 1
        %s318 = smul.addr %s317, 2
        %s319 = scalar_lea.vmem %s1, %s318
        %p320 = scmp.lt.s32.totalorder %s25, 1
        %s321 = scalar_select %p320, %s25, 1
        %s322 = smul.addr %s321, 2
        %s323 = smul.addr %s322, 4
        %s324 = scalar_lea.vmem %s2, %s323
        %v326 = vld [vmem:[%s315] sm:$0xff]
        %v327 = vld [vmem:[%s319] sm:$0x3]
        %v328 = vld [vmem:[%s324] sm:$0x77]
        %v330 = vlaneseq
        %v331 = vshrl.u32 %v330, 7
        %v332 = vsub.s32 0, %v331
        %v333 = vrot.slane %v327, %v332
        %v334 = vlaneseq
        %v335 = vshrl.u32 %v334, 7
        %v336 = vsub.s32 1, %v335
        %v337 = vrot.slane %v327, %v336
        %v338 = vcombine.low %v333, %v337
        %v340 = vmul.f32 %v326, %v338
        %v342 = vcombine.high %v340, %v340
        %vm346 = vcmask 1043456
        %v347 = vsel %vm346, %v340, %v333
        %v348 = vsel %vm346, %v342, %v337
        %vm349 = vcmask 1044480
        %v350 = vsel %vm349, %v347, 0.0
        %v351 = vsel %vm349, %v348, 0.0
        %v352 = vlaneseq
        %v353 = vand.u32 %v352, 127
        %v354 = vadd.s32 %v353, 128
        %vm355 = vcmp.lt.s32.totalorder %v353, 0
        %v356 = vsub.s32 0, %v353
        %v357 = vsel %vm355, %v356, %v353
        %v358 = vshrl.u32 %v357, 4
        %v359 = vand.u32 %v357, 15
        %v360 = vsub.s32 0, %v359
        %v361 = vsel %vm355, %v360, %v359
        %vm362 = vcmp.lt.s32.totalorder %v354, 0
        %v363 = vsub.s32 0, %v354
        %v364 = vsel %vm362, %v363, %v354
        %v365 = vshrl.u32 %v364, 4
        %v366 = vand.u32 %v364, 15
        %v367 = vsub.s32 0, %v366
        %v368 = vsel %vm362, %v367, %v366
        %vm369 = vcmp.ne.s32.totalorder %v361, 0
        %vm370 = vcmp.ne.s32.totalorder %v368, 0
        %vm371 = vcmp.lt.s32.totalorder %v361, 0
        %vm372 = vcmp.lt.s32.totalorder %v368, 0
        %vm373 = vmand %vm371, %vm369
        %vm374 = vmand %vm372, %vm370
        %v375 = vadd.s32 %v361, 16
        %v376 = vadd.s32 %v368, 16
        %v377 = vsel %vm373, %v375, %v361
        %v378 = vsel %vm374, %v376, %v368
        %vm379 = vcmp.ne.s32.totalorder %v377, 0
        %vm380 = vcmp.ne.s32.totalorder %v378, 0
        %vm381 = vcmp.ne.s32.totalorder %v377, 15
        %vm382 = vcmp.ne.s32.totalorder %v378, 15
        %vm383 = vcmp.ge.s32.totalorder %v353, 16
        %vm384 = vcmp.ge.s32.totalorder %v354, 16
        %vm385 = vcmp.lt.s32.totalorder %v353, 240
        %vm386 = vcmp.lt.s32.totalorder %v354, 240
        %387 = vrot.lane.b32.xlu0 %v350, 17
        %v388 = vpop.permute.xlu0 %387
        %389 = vrot.lane.b32.xlu0 %v351, 17
        %v390 = vpop.permute.xlu0 %389
        %vm391 = vcmp.lt.s32.totalorder %v353, 17
        %v392 = vsel %vm391, %v388, %v390
        %v393 = vsel %vm391, %v390, %v388
        %vm394 = vmand %vm383, %vm379
        %vm395 = vmand %vm384, %vm380
        %v396 = vsel %vm394, 1, 0
        %v397 = vsel %vm395, 1, 0
        %vm398 = vcmp.eq.s32.totalorder %v396, 1
        %vm399 = vcmp.eq.s32.totalorder %v397, 1
        %v400 = vsel %vm398, %v393, 0.0
        %v401 = vsel %vm399, %v392, 0.0
        %402 = vrot.lane.b32.xlu0 %v350, 16
        %v403 = vpop.permute.xlu0 %402
        %404 = vrot.lane.b32.xlu0 %v351, 16
        %v405 = vpop.permute.xlu0 %404
        %vm406 = vcmp.lt.s32.totalorder %v353, 16
        %v407 = vsel %vm406, %v403, %v405
        %v408 = vsel %vm406, %v405, %v403
        %v409 = vsel %vm383, 1, 0
        %v410 = vsel %vm384, 1, 0
        %vm411 = vcmp.eq.s32.totalorder %v409, 1
        %vm412 = vcmp.eq.s32.totalorder %v410, 1
        %v413 = vsel %vm411, %v408, 0.0
        %v414 = vsel %vm412, %v407, 0.0
        %415 = vrot.lane.b32.xlu0 %v350, 15
        %v416 = vpop.permute.xlu0 %415
        %417 = vrot.lane.b32.xlu0 %v351, 15
        %v418 = vpop.permute.xlu0 %417
        %vm419 = vcmp.lt.s32.totalorder %v353, 15
        %v420 = vsel %vm419, %v416, %v418
        %v421 = vsel %vm419, %v418, %v416
        %vm422 = vmand %vm383, %vm381
        %vm423 = vmand %vm384, %vm382
        %v424 = vsel %vm422, 1, 0
        %v425 = vsel %vm423, 1, 0
        %vm426 = vcmp.eq.s32.totalorder %v424, 1
        %vm427 = vcmp.eq.s32.totalorder %v425, 1
        %v428 = vsel %vm426, %v421, 0.0
        %v429 = vsel %vm427, %v420, 0.0
        %430 = vrot.lane.b32.xlu0 %v350, 1
        %v431 = vpop.permute.xlu0 %430
        %432 = vrot.lane.b32.xlu0 %v351, 1
        %v433 = vpop.permute.xlu0 %432
        %vm434 = vcmp.lt.s32.totalorder %v353, 1
        %v435 = vsel %vm434, %v431, %v433
        %v436 = vsel %vm434, %v433, %v431
        %v437 = vsel %vm379, 1, 0
        %v438 = vsel %vm380, 1, 0
        %vm439 = vcmp.eq.s32.totalorder %v437, 1
        %vm440 = vcmp.eq.s32.totalorder %v438, 1
        %v441 = vsel %vm439, %v436, 0.0
        %v442 = vsel %vm440, %v435, 0.0
        %443 = vrot.lane.b32.xlu0 %v350, 127
        %v444 = vpop.permute.xlu0 %443
        %445 = vrot.lane.b32.xlu0 %v351, 127
        %v446 = vpop.permute.xlu0 %445
        %vm447 = vcmp.lt.s32.totalorder %v353, 127
        %v448 = vsel %vm447, %v444, %v446
        %v449 = vsel %vm447, %v446, %v444
        %v450 = vsel %vm381, 1, 0
        %v451 = vsel %vm382, 1, 0
        %vm452 = vcmp.eq.s32.totalorder %v450, 1
        %vm453 = vcmp.eq.s32.totalorder %v451, 1
        %v454 = vsel %vm452, %v448, 0.0
        %v455 = vsel %vm453, %v449, 0.0
        %456 = vrot.lane.b32.xlu0 %v350, 113
        %v457 = vpop.permute.xlu0 %456
        %458 = vrot.lane.b32.xlu0 %v351, 113
        %v459 = vpop.permute.xlu0 %458
        %vm460 = vcmp.lt.s32.totalorder %v353, 113
        %v461 = vsel %vm460, %v457, %v459
        %v462 = vsel %vm460, %v459, %v457
        %vm463 = vmand %vm385, %vm379
        %vm464 = vmand %vm386, %vm380
        %v465 = vsel %vm463, 1, 0
        %v466 = vsel %vm464, 1, 0
        %vm467 = vcmp.eq.s32.totalorder %v465, 1
        %vm468 = vcmp.eq.s32.totalorder %v466, 1
        %v469 = vsel %vm467, %v461, 0.0
        %v470 = vsel %vm468, %v462, 0.0
        %471 = vrot.lane.b32.xlu0 %v350, 112
        %v472 = vpop.permute.xlu0 %471
        %473 = vrot.lane.b32.xlu0 %v351, 112
        %v474 = vpop.permute.xlu0 %473
        %vm475 = vcmp.lt.s32.totalorder %v353, 112
        %v476 = vsel %vm475, %v472, %v474
        %v477 = vsel %vm475, %v474, %v472
        %v478 = vsel %vm385, 1, 0
        %v479 = vsel %vm386, 1, 0
        %vm480 = vcmp.eq.s32.totalorder %v478, 1
        %vm481 = vcmp.eq.s32.totalorder %v479, 1
        %v482 = vsel %vm480, %v476, 0.0
        %v483 = vsel %vm481, %v477, 0.0
        %484 = vrot.lane.b32.xlu0 %v350, 111
        %v485 = vpop.permute.xlu0 %484
        %486 = vrot.lane.b32.xlu0 %v351, 111
        %v487 = vpop.permute.xlu0 %486
        %vm488 = vcmp.lt.s32.totalorder %v353, 111
        %v489 = vsel %vm488, %v485, %v487
        %v490 = vsel %vm488, %v487, %v485
        %vm491 = vmand %vm385, %vm381
        %vm492 = vmand %vm386, %vm382
        %v493 = vsel %vm491, 1, 0
        %v494 = vsel %vm492, 1, 0
        %vm495 = vcmp.eq.s32.totalorder %v493, 1
        %vm496 = vcmp.eq.s32.totalorder %v494, 1
        %v497 = vsel %vm495, %v489, 0.0
        %v498 = vsel %vm496, %v490, 0.0
        %v500 = vcombine.high %v328, %v328
        %vm502 = vcmask 1042432
        %v503 = vsel %vm502, %v328, 0.0
        %v504 = vsel %vm502, %v500, 0.0
        %v505 = vpack.c.bf16 %v413, %v400
        %v506 = vpack.c.bf16 %v414, %v401
        %v507 = vpack.c.bf16 %v441, %v428
        %v508 = vpack.c.bf16 %v442, %v429
        %v509 = vpack.c.bf16 %v454, %v350
        %v510 = vpack.c.bf16 %v455, %v351
        %v511 = vpack.c.bf16 %v482, %v469
        %v512 = vpack.c.bf16 %v483, %v470
        %v513 = vpack.c.bf16 %v503, %v497
        %v514 = vpack.c.bf16 %v504, %v498
        %v515 = vld [vmem:[%s3] sm:$0xf]
        %v516 = vld [vmem:[%s3 + $0x4] sm:$0xf]
        %v517 = vld [vmem:[%s3 + $0x8] sm:$0xf]
        %v521 = vunpack.c.l.b16 %v515
        %v522 = vunpack.c.l.b16 %v516
        %v523 = vunpack.c.l.b16 %v517
        %v524 = vpack.c.b16 %v522, %v521
        %v525 = vpack.c.b16 %v523, %v523
        %vm526 = vcmask 654336
        %v528 = vsel %vm526, %v524, 0
        %v531 = vsel %vm526, %v525, 0
        %533 = vmatprep.subr.bf16.mxu0 %v506
        %534 = vmatpush1.bf16.msra.mxu0 %v505
        %535 = vmatprep.subr.bf16.mxu0 %v508
        %536 = vmatpush1.bf16.msra.mxu0 %v507
        %537 = vmatprep.subr.bf16.mxu0 %v510
        %538 = vmatpush1.bf16.msra.mxu0 %v509
        %539 = vmatprep.subr.bf16.mxu0 %v512
        %540 = vmatpush1.bf16.msra.mxu0 %v511
        %541 = vmatprep.subr.bf16.mxu0 %v514
        %542 = vmatpush1.bf16.msra.mxu0 %v513
        %543 = vmatprep.subr.bf16.mxu0 0
        %544 = vmatpush1.bf16.msra.mxu0 0
        %545 = vmatprep.subr.bf16.mxu0 0
        %546 = vmatpush1.bf16.msra.mxu0 0
        %547 = vmatprep.subr.bf16.mxu0 0
        %548 = vmatpush1.bf16.msra.mxu0 0
        %549 = vmatprep.subr.bf16.mxu0 0
        %550 = vmatpush1.bf16.msra.mxu0 0
        %551 = vmatprep.subr.bf16.mxu0 0
        %552 = vmatpush1.bf16.msra.mxu0 0
        %553 = vmatprep.subr.bf16.mxu0 0
        %554 = vmatpush1.bf16.msra.mxu0 0
        %555 = vmatprep.subr.bf16.mxu0 0
        %556 = vmatpush1.bf16.msra.mxu0 0
        %557 = vmatprep.subr.bf16.mxu0 0
        %558 = vmatpush1.bf16.msra.mxu0 0
        %559 = vmatprep.subr.bf16.mxu0 0
        %560 = vmatpush1.bf16.msra.mxu0 0
        %561 = vmatprep.subr.bf16.mxu0 0
        %562 = vmatpush1.bf16.msra.mxu0 0
        %563 = vmatprep.subr.bf16.mxu0 0
        %564 = vmatpush1.bf16.msra.mxu0 0
        %565 = vmatprep.mubr.bf16.mxu0 0
        %566 = vmatmul.mubr.bf16.gmra.mrb[0].mxu0 %v528
        %v567 = vpop.f32.mrb[0].mxu0
        %v568 = vadd.f32 0.0, %v567
        %v569 = vpop.f32.mrb[0].mxu0
        %v570 = vadd.f32 0.0, %v569
        %v571 = vpop.f32.mrb[0].mxu0
        %v572 = vadd.f32 0.0, %v571
        %v573 = vpop.f32.mrb[0].mxu0
        %v574 = vadd.f32 0.0, %v573
        %575 = vmatprep.mubr.bf16.mxu0 0
        %576 = vmatmul.mubr.bf16.gmra.mrb[0].mxu0 %v531
        %v577 = vpop.f32.mrb[0].mxu0
        %v578 = vadd.f32 0.0, %v577
        %v579 = vpop.f32.mrb[0].mxu0
        %v580 = vadd.f32 0.0, %v579
        %v581 = vpop.f32.mrb[0].mxu0
        %v582 = vpop.f32.mrb[0].mxu0
        %583 = vdwg.mxu0
        %vm584 = vcmp.gt.f32.partialorder %v572, 0.0
        %vm585 = vcmp.gt.f32.partialorder %v574, 0.0
        %v586 = vsel %vm584, %v572, 1.0
        %v587 = vsel %vm585, %v574, 1.0
        %v588 = vrcp.pop %v586
        %v589 = vmul.f32 9.0, %v588
        %v590 = vrcp.pop %v587
        %v591 = vmul.f32 9.0, %v590
        %v592 = vsel %vm584, %v589, 0.0
        %v593 = vsel %vm585, %v591, 0.0
        %v594 = vlaneseq
        %v595 = vshrl.u32 %v594, 7
        %v596 = vsub.s32 0, %v595
        %v597 = vrot.slane %v592, %v596
        %v598 = vlaneseq
        %v599 = vshrl.u32 %v598, 7
        %v600 = vsub.s32 0, %v599
        %v601 = vrot.slane %v593, %v600
        %v602 = vmul.f32 %v568, %v597
        %v603 = vmul.f32 %v570, %v601
        %v604 = vld [vmem:[%s4] sm:$0xff]
        %606 = vset.pattern.permute.xlu0 0
        %607 = vperm.xlu0 %606, %v604
        %v608 = vpop.permute.xlu0 %607
        %v610 = vadd.f32 %v602, %v608
        %v611 = vadd.f32 %v603, %v608
        %v612 = vsel %vm584, 1, 0
        %v613 = vsel %vm585, 1, 0
        %v614 = vlaneseq
        %v615 = vshrl.u32 %v614, 7
        %v616 = vsub.s32 0, %v615
        %v617 = vrot.slane %v612, %v616
        %v618 = vlaneseq
        %v619 = vshrl.u32 %v618, 7
        %v620 = vsub.s32 0, %v619
        %v621 = vrot.slane %v613, %v620
        %vm622 = vcmp.eq.s32.totalorder %v617, 1
        %vm623 = vcmp.eq.s32.totalorder %v621, 1
        %v624 = vsel %vm622, %v610, 0.0
        %v625 = vsel %vm623, %v611, 0.0
        %v626 = vld [vmem:[%s5] sm:$0xff]
        %628 = vset.pattern.permute.xlu0 0
        %629 = vperm.xlu0 %628, %v626
        %v630 = vpop.permute.xlu0 %629
        %v632 = vadd.f32 %v578, %v630
        %v633 = vadd.f32 %v580, %v630
        %v634 = vxor.u32 %v632, 2147483648
        %v635 = vxor.u32 %v633, 2147483648
        %v636 = vmul.f32 %v634, 1.442695
        %v637 = vpow.pop %v636
        %v638 = vmul.f32 %v635, 1.442695
        %v639 = vpow.pop %v638
        %v640 = vadd.f32 %v637, 1.0
        %v641 = vadd.f32 %v639, 1.0
        %v642 = vrcp.pop %v640
        %v643 = vmul.f32 1.0, %v642
        %v644 = vrcp.pop %v641
        %v645 = vmul.f32 1.0, %v644
        %v646 = vmul.f32 %v624, %v643
        %v647 = vmul.f32 %v625, %v645
        %v648 = vmax.f32 %v646, 0.0
        %v649 = vmax.f32 %v647, 0.0
        %650 = vst [vmem:[%s303] sm:$0xff] %v648
        %651 = vst [vmem:[%s303 + $0x8] sm:$0xff] %v649
        %v652 = vcvt.s32.f32 %v612
        %v653 = vcvt.s32.f32 %v613
        %v656 = vcombine.low %v652, %v653
        %v658 = vunpack.c.l.s4 1966171168
        %v659 = vunpack.c.0.s8 %v658
        %v660 = vlaneseq
        %v661 = vshrl.u32 %v660, 7
        %v662 = vsub.s32 %v659, %v661
        %v663 = vrot.slane %v656, %v662
        %v665 = vunpack.c.l.s4 1966171168
        %v666 = vunpack.c.0.s8 %v665
        %v667 = vlaneseq
        %v668 = vshrl.u32 %v667, 7
        %v669 = vsub.s32 %v666, %v668
        %v670 = vrot.slane %v663, %v669
        %v672 = vlaneseq
        %vm673 = vcmp.ge.s32.totalorder %v672, 0
        %vm674 = vcmp.lt.s32.totalorder %v672, 256
        %vm675 = vmand %vm673, %vm674
        %676 = vst.msk [vmem:[%s310] sm:$0x3] %vm675, %v670
        %s677 = sand.u32 %s174, 1
        %s678 = scalar_lea.sflag [#allocation3], %s677
        %s679 = sand.u32 %s174, 1
        %s680 = smul.addr %s679, 16
        %s681 = scalar_lea.vmem [#allocation2], %s680
        %s682 = sand.u32 %s200, 1
        %s683 = scalar_lea.sflag [#allocation5], %s682
        %s684 = sand.u32 %s200, 1
        %s685 = smul.addr %s684, 2
        %s686 = scalar_lea.vmem [#allocation4], %s685
        // Predicated region
        $region45: #{tpu_custom_call.1} parent=43 // pred_check
          %p687 = pneg %p184
        $region46: #{tpu_custom_call.1} parent=43 // pred_check_branch
          %689 = sbr.rel (%p687) target = $region48
        $region47: #{tpu_custom_call.1} parent=43 // pred_region
          %s691 = ssub.s32 256, 256
          %692 = vsyncadd %s678, %s691
          %s693 = smul.addr %s25, 2
          %s694 = smul.addr %s693, 128
          %s695 = scalar_lea.hbm %s6, %s694
          %s697 = sshll.u32 %s681, 4
          %s698 = int_to_ptr.vmem [resolvable:$true] %s697
          %700 = dma.vmem_to_hbm [thread:$0]  %s698, 256, %s695, %s678
        $region48: #{tpu_custom_call.1} parent=43 // pred_fallthru
          _
        // Predicated region
        $region49: #{tpu_custom_call.1} parent=43 // pred_check
          %p701 = pneg %p210
        $region50: #{tpu_custom_call.1} parent=43 // pred_check_branch
          %703 = sbr.rel (%p701) target = $region52
        $region51: #{tpu_custom_call.1} parent=43 // pred_region
          %s705 = ssub.s32 32, 32
          %706 = vsyncadd %s683, %s705
          %s707 = smul.addr %s25, 2
          %s708 = smul.addr %s707, 16
          %s709 = scalar_lea.hbm %s7, %s708
          %s711 = sshll.u32 %s686, 4
          %s712 = int_to_ptr.vmem [resolvable:$true] %s711
          %714 = dma.vmem_to_hbm [thread:$0]  %s712, 32, %s709, %s683
        $region52: #{tpu_custom_call.1} parent=43 // pred_fallthru
          _
      $region44: #{tpu_custom_call.1} parent=5 // pred_fallthru
        _
      %p715 = scmp.le.s32.totalorder 2, %s20
      // Predicated region
      $region53: #{tpu_custom_call.1} parent=5 // pred_check
        %p716 = pneg %p715
      $region54: #{tpu_custom_call.1} parent=5 // pred_check_branch
        %718 = sbr.rel (%p716) target = $region56
      $region55: #{tpu_custom_call.1} parent=5 // pred_region
        %s719 = ssub.s32 %s20, 2
        // Predicated region
        $region57: #{tpu_custom_call.1} parent=55 // pred_check
          %p720 = pneg %p190
        $region58: #{tpu_custom_call.1} parent=55 // pred_check_branch
          %722 = sbr.rel (%p720) target = $region60
        $region59: #{tpu_custom_call.1} parent=55 // pred_region
          %s723 = sand.u32 %s175, 1
          %s724 = scalar_lea.sflag [#allocation3], %s723
          %s725 = sand.u32 %s175, 1
          %s726 = smul.addr %s725, 16
          %s727 = scalar_lea.vmem [#allocation2], %s726
          %728 = dma.done %s724, 256
        $region60: #{tpu_custom_call.1} parent=55 // pred_fallthru
          _
        // Predicated region
        $region61: #{tpu_custom_call.1} parent=55 // pred_check
          %p729 = pneg %p216
        $region62: #{tpu_custom_call.1} parent=55 // pred_check_branch
          %731 = sbr.rel (%p729) target = $region64
        $region63: #{tpu_custom_call.1} parent=55 // pred_region
          %s732 = sand.u32 %s201, 1
          %s733 = scalar_lea.sflag [#allocation5], %s732
          %s734 = sand.u32 %s201, 1
          %s735 = smul.addr %s734, 2
          %s736 = scalar_lea.vmem [#allocation4], %s735
          %737 = dma.done %s733, 32
        $region64: #{tpu_custom_call.1} parent=55 // pred_fallthru
          _
      $region56: #{tpu_custom_call.1} parent=5 // pred_fallthru
        _
    $region6: #{tpu_custom_call.1} parent=1 // loop_footer
      %s24 = sadd.s32 1, %s20
    $region7: #{tpu_custom_call.1} parent=1 // loop_footer_branch
      %19 = sbr.rel target = $region3
    $region8: #{tpu_custom_call.1} parent=1 // loop_exit
      _
    %738 = vsyncpa [#allocation3], 1
    %s739 = scalar_lea.sflag [#allocation3], 1
    %740 = vsyncpa %s739, 1
    %741 = vsyncpa [#allocation5], 1
    %s742 = scalar_lea.sflag [#allocation5], 1
    %743 = vsyncpa %s742, 1

</llo_original>
